<compile_context>
chip_gen: v7x
topology: tpu7x:2x2x1
jax: 0.10.0
libtpu: 0.0.40
codegen_flags: <defaults>
</compile_context>

<pallas_src>
import math
from collections import namedtuple
from functools import partial

import jax
import jax.numpy as jnp
from jax.experimental import pallas as pl
from jax.experimental.pallas import tpu as pltpu

LANE = 128      # node-axis padding granularity (output last dim stays lane-dense)
D_SUBLANE = 16  # target-dim padding: covers bf16 W sublane tile and f32 output
MAX_TN = 1024   # largest node tile along the lane axis


def _round_up(x, m):
    return (x + m - 1) // m * m


def _next_pow2(x):
    return 1 << max(0, (x - 1).bit_length())


def _vmem_limit_bytes():
    # v7x has 64 MiB VMEM per TensorCore vs 128 MiB on v5e/v6e; size the scoped
    # limit from the hardware with headroom, conservative fallback if the
    # query is unavailable.
    try:
        cap = int(getattr(pltpu.get_tpu_info(), "vmem_capacity_bytes",
                          64 * 1024 * 1024))
    except Exception:
        cap = 64 * 1024 * 1024
    return int(min(cap * 3 // 4, 64 * 1024 * 1024))


_VMEM_LIMIT = _vmem_limit_bytes()


# ----------------------------- Pallas kernel ------------------------------ #

def _fused_readout_kernel(xt_ref, w_ref, b_ref, o_ref):
    # xt_ref: [H, tn]     compute dtype (nodes on the 128-lane axis)
    # w_ref:  [D_pad, H]  compute dtype
    # b_ref:  [D_pad, 1]  f32
    # o_ref:  [D_pad, tn] f32 -- lane-dense store, D only padded to 16 sublanes
    acc = jnp.dot(w_ref[...], xt_ref[...], preferred_element_type=jnp.float32)
    o_ref[...] = acc + b_ref[...]


@partial(jax.jit, static_argnames=("tn",))
def fused_readout(xt_stack, w_pad, b_pad, *, tn):
    """All targets in one pallas_call.

    xt_stack: [T, H, N_pad]      compute dtype, N_pad % tn == 0, tn % 128 == 0
    w_pad:    [T, D_pad, H]      compute dtype, D_pad % 16 == 0
    b_pad:    [T, D_pad, 1]      float32
    returns:  [T, D_pad, N_pad]  float32
    """
    T, H, n_pad = xt_stack.shape
    _, d_pad, _ = w_pad.shape
    grid = (T, n_pad // tn)  # target axis outer: W/b reused across node tiles
    return pl.pallas_call(
        _fused_readout_kernel,
        out_shape=jax.ShapeDtypeStruct((T, d_pad, n_pad), jnp.float32),
        grid=grid,
        in_specs=[
            pl.BlockSpec((None, H, tn), lambda t, n: (t, 0, n)),
            pl.BlockSpec((None, d_pad, H), lambda t, n: (t, 0, 0)),
            pl.BlockSpec((None, d_pad, 1), lambda t, n: (t, 0, 0)),
        ],
        out_specs=pl.BlockSpec((None, d_pad, tn), lambda t, n: (t, 0, n)),
        compiler_params=pltpu.CompilerParams(
            dimension_semantics=("parallel", "parallel"),
            vmem_limit_bytes=_VMEM_LIMIT,
        ),
    )(xt_stack, w_pad, b_pad)


# --------------------------- VCNReadout wrapper ---------------------------- #

Target = namedtuple("Target", ["name", "dim"])


class VCNReadout:
    """JAX/Pallas port of the PyTorch VCNReadout.

    One Linear(hidden_dim -> target.dim) per target, all targets evaluated in
    a single fused Pallas call with [D_pad, node_tile] output tiles (node axis
    on the 128 lanes, so the tiny target dim only pads to 16 sublanes).
    """

    def __init__(self, hidden_dim, targets, key, compute_dtype=jnp.bfloat16):
        self.hidden_dim = hidden_dim
        self.targets = targets
        self.compute_dtype = compute_dtype  # jnp.float32 for exact parity
        # NOTE: one large target inflates padding for all; bucket targets by
        # padded dim into separate calls if target dims diverge a lot.
        self.d_pad = _round_up(max(t.dim for t in targets), D_SUBLANE)

        # f32 "master" params (PyTorch-Linear-like init, weight is [out, in]),
        # plus fused / padded / cast parameters built ONCE here.
        self.params = []
        w_pad, b_pad = [], []
        bound = 1.0 / math.sqrt(hidden_dim)
        for t in targets:
            key, kw, kb = jax.random.split(key, 3)
            w = jax.random.uniform(kw, (t.dim, hidden_dim), jnp.float32, -bound, bound)
            b = jax.random.uniform(kb, (t.dim,), jnp.float32, -bound, bound)
            self.params.append((w, b))
            wp = jnp.zeros((self.d_pad, hidden_dim), jnp.float32).at[: t.dim].set(w)
            bp = jnp.zeros((self.d_pad, 1), jnp.float32).at[: t.dim, 0].set(b)
            w_pad.append(wp.astype(compute_dtype))
            b_pad.append(bp)
        self.w_pad = jnp.stack(w_pad)  # [T, D_pad, H]  compute dtype
        self.b_pad = jnp.stack(b_pad)  # [T, D_pad, 1]  f32

    def forward(self, h_dict):
        # h_dict: {target_name: [num_nodes_t, hidden_dim]} -- stands in for the
        # graph's per-node 'hidden' attribute gathered per target name.
        # TODO(synk): graph-node attribute gathering (G.node[v]['hidden']) is a
        # host-side dict lookup in the original module; it has no Pallas op.
        # TODO(synk): callers holding a pre-stacked [T, H, N] tensor should call
        # fused_readout directly to skip this pad/transpose/stack copy.
        counts = [h_dict[t.name].shape[0] for t in self.targets]
        n_max = max(counts)
        # Bucket the node axis to a power of two >= 128: bounds recompilation
        # (tn, n_pad come from a small fixed set) and keeps stores lane-dense.
        n_pad = max(LANE, _next_pow2(n_max))
        tn = min(MAX_TN, n_pad)

        xs = []
        for t, n in zip(self.targets, counts):
            x = h_dict[t.name].astype(self.compute_dtype)       # [n, H]
            xs.append(jnp.pad(x.T, ((0, 0), (0, n_pad - n))))   # [H, n_pad]
        xt_stack = jnp.stack(xs)                                 # [T, H, n_pad]

        y = fused_readout(xt_stack, self.w_pad, self.b_pad, tn=tn)  # [T,D_pad,N_pad]

        return {
            t.name: y[i, : t.dim, : counts[i]].T                 # [n_t, D_t]
            for i, t in enumerate(self.targets)
        }


# --------------------------------- main ------------------------------------ #

if __name__ == "__main__":
    key = jax.random.PRNGKey(0)

    hidden_dim = 32
    targets = [Target("v", 8), Target("c", 16)]

    key, k_model, k_v, k_c = jax.random.split(key, 4)
    readout = VCNReadout(hidden_dim, targets, k_model)

    # Synthetic per-target node hidden states (different node counts exercise
    # the ragged / padding path).
    h_dict = {
        "v": jax.random.normal(k_v, (8, hidden_dim), jnp.float32),
        "c": jax.random.normal(k_c, (12, hidden_dim), jnp.float32),
    }

    out = readout.forward(h_dict)
    jax.block_until_ready(out)

    # Pure-JAX f32 reference check (bf16 compute path -> loose tolerance).
    ok = True
    for (w, b), t in zip(readout.params, targets):
        ref = h_dict[t.name] @ w.T + b[None, :]
        assert out[t.name].shape == (h_dict[t.name].shape[0], t.dim)
        ok &= bool(jnp.allclose(out[t.name], ref, atol=3e-2, rtol=3e-2))

    if ok:
        print("KERNEL_OK")
</pallas_src>

<mosaic_0001>
module attributes {stable_mosaic.version = 11 : i64} {
  func.func @_fused_readout_kernel(%arg0: i32, %arg1: i32, %arg2: memref<1x32x128xbf16, #tpu.memory_space<vmem>>, %arg3: memref<1x16x32xbf16, #tpu.memory_space<vmem>>, %arg4: memref<1x16x1xf32, #tpu.memory_space<vmem>>, %arg5: memref<1x16x128xf32, #tpu.memory_space<vmem>>) attributes {dimension_semantics = [#tpu.dimension_semantics<parallel>, #tpu.dimension_semantics<parallel>], iteration_bounds = array<i64: 2, 1>, scalar_prefetch = 0 : i64, scratch_operands = 0 : i64, tpu.core_type = #tpu.core_type<tc>, window_params = [{transform_indices = @transform_0, window_bounds = array<i64: 1, 32, 128>}, {transform_indices = @transform_1, window_bounds = array<i64: 1, 16, 32>}, {transform_indices = @transform_2, window_bounds = array<i64: 1, 16, 1>}, {transform_indices = @transform_3, window_bounds = array<i64: 1, 16, 128>}]} {
    %c0 = arith.constant 0 : index
    %c0_0 = arith.constant 0 : index
    %c0_1 = arith.constant 0 : index
    %0 = vector.load %arg3[%c0, %c0_0, %c0_1] : memref<1x16x32xbf16, #tpu.memory_space<vmem>>, vector<1x16x32xbf16>
    %1 = vector.shape_cast %0 : vector<1x16x32xbf16> to vector<16x32xbf16>
    %c0_2 = arith.constant 0 : index
    %c0_3 = arith.constant 0 : index
    %c0_4 = arith.constant 0 : index
    %2 = vector.load %arg2[%c0_2, %c0_3, %c0_4] : memref<1x32x128xbf16, #tpu.memory_space<vmem>>, vector<1x32x128xbf16>
    %3 = vector.shape_cast %2 : vector<1x32x128xbf16> to vector<32x128xbf16>
    %cst = arith.constant dense<0.000000e+00> : vector<16x128xf32>
    %4 = tpu.matmul %1, %3, %cst {dimension_numbers = #tpu.dot_dimension_numbers<[1], [0], [0], [1], [0, 0, 1, 1], [], []>} : vector<16x32xbf16>, vector<32x128xbf16>, vector<16x128xf32> -> vector<16x128xf32>
    %c0_5 = arith.constant 0 : index
    %c0_6 = arith.constant 0 : index
    %c0_7 = arith.constant 0 : index
    %5 = vector.load %arg4[%c0_5, %c0_6, %c0_7] : memref<1x16x1xf32, #tpu.memory_space<vmem>>, vector<1x16x1xf32>
    %6 = vector.shape_cast %5 : vector<1x16x1xf32> to vector<16x1xf32>
    %7 = vector.broadcast %6 : vector<16x1xf32> to vector<16x128xf32>
    %8 = arith.addf %4, %7 : vector<16x128xf32>
    %c0_8 = arith.constant 0 : index
    %c0_9 = arith.constant 0 : index
    %c0_10 = arith.constant 0 : index
    %9 = vector.load %arg5[%c0_8, %c0_9, %c0_10] : memref<1x16x128xf32, #tpu.memory_space<vmem>>, vector<1x16x128xf32>
    %10 = vector.shape_cast %9 : vector<1x16x128xf32> to vector<16x128xf32>
    %11 = vector.shape_cast %8 : vector<16x128xf32> to vector<1x16x128xf32>
    tpu.vector_store %arg5[%c0_8, %c0_9, %c0_10], %11 {strides = array<i32>} : memref<1x16x128xf32, #tpu.memory_space<vmem>>, vector<1x16x128xf32>,
    return
  }
  func.func @transform_0(%arg0: i32, %arg1: i32) -> (i32, i32, i32) {
    %c0_i32 = arith.constant 0 : i32
    %c0_i32_0 = arith.constant 0 : i32
    return %arg0, %c0_i32, %arg1 : i32, i32, i32
  }
  func.func @transform_1(%arg0: i32, %arg1: i32) -> (i32, i32, i32) {
    %c0_i32 = arith.constant 0 : i32
    %c0_i32_0 = arith.constant 0 : i32
    %c0_i32_1 = arith.constant 0 : i32
    return %arg0, %c0_i32, %c0_i32_0 : i32, i32, i32
  }
  func.func @transform_2(%arg0: i32, %arg1: i32) -> (i32, i32, i32) {
    %c0_i32 = arith.constant 0 : i32
    %c0_i32_0 = arith.constant 0 : i32
    %c0_i32_1 = arith.constant 0 : i32
    return %arg0, %c0_i32, %c0_i32_0 : i32, i32, i32
  }
  func.func @transform_3(%arg0: i32, %arg1: i32) -> (i32, i32, i32) {
    %c0_i32 = arith.constant 0 : i32
    %c0_i32_0 = arith.constant 0 : i32
    return %arg0, %c0_i32, %arg1 : i32, i32, i32
  }
}

</mosaic_0001>

<llo_original>
// kernel: fused_readout.1
$region0: #{fused_readout.1}
  #allocation0 [shape = 'u32[]', space=smem, size = 0x4, offset = 0x4, fixed_abs, tag = 'smem constant byte address 0x4 - core index']
  #allocation1 [shape = 'u32[144,128]{1,0:T(1,128)}', space=vmem, size = 0x12000, scoped, tag = 'internal scratch']
  %s0 = inlined_call_operand.vmem [shape: bf16[2,32,128], index: 0, kind: input, shape index: {}]
  %s1 = inlined_call_operand.hbm [shape: bf16[2,16,32], index: 1, kind: input, shape index: {}]
  %s2 = inlined_call_operand.vmem [shape: f32[2,16,1], index: 2, kind: input, shape index: {}]
  %s3 = inlined_call_operand.hbm [shape: f32[2,16,128], index: 3, kind: output, shape index: {}]
  %s4 = sld [smem:[#allocation0]]
  $region49: #{fused_readout.1} parent=0
    _
  %s6 = ssub.s32 1, %s4
  %s7 = scalar_select 0, %s6, %s4
  $region1: #{fused_readout.1} parent=0
    #allocation2 [shape = 'u8[8192]{0}', space=vmem, size = 0x2000, scoped, tag = 'input window, operand 1']
    #allocation3 [shape = 's32[2]{0}', space=sflag, size = 0x8, scoped, tag = 'scoped memory for fused_readout.1']
    #allocation4 [shape = 's32[2]{0}', space=sflag, size = 0x8, scoped, tag = 'scoped memory for fused_readout.1']
    #allocation5 [shape = 'u8[16384]{0}', space=vmem, size = 0x4000, scoped, tag = 'output window, operand 0']
    %8 = vsyncpa [#allocation3], 0
    %s9 = scalar_lea.sflag [#allocation3], 1
    %10 = vsyncpa %s9, 0
    %11 = vsyncpa [#allocation4], 0
    %s12 = scalar_lea.sflag [#allocation4], 1
    %13 = vsyncpa %s12, 0
    loop: start=0, step=1, limit=4
    $region2: #{fused_readout.1} parent=1 // loop_pre_header
      _
    $region3: #{fused_readout.1} parent=1 // loop_header
      %s15 = sphi 0, %s19
      %p16 = scmp.ge.s32.totalorder %s15, 4
      %s22 = sphi 0, %s34
      %s23 = sphi 0, %s30
      %s24 = sphi 0, %s22
      %s25 = sphi 0, %s23
      %s26 = sphi 0, %s24
      %s27 = sphi 0, %s25
      %s39 = sphi 0, %s41
      %s42 = sphi 0, %s39
      %s43 = sphi 0, %s42
      %s59 = sphi 0, %s43
      %s65 = sphi 0, %s67
      %s68 = sphi 0, %s65
      %s69 = sphi 0, %s68
      %s85 = sphi 0, %s69
      %s91 = sphi 0, %s93
      %s94 = sphi 0, %s91
      %s95 = sphi 0, %s94
      %s111 = sphi 0, %s95
      %s119 = sphi 0, %s121
      %s122 = sphi 0, %s119
      %s123 = sphi 0, %s122
      %s139 = sphi 0, %s123
    $region4: #{fused_readout.1} parent=1 // loop_header_branch
      %18 = sbr.rel (%p16) target = $region8
    $region5: #{fused_readout.1} parent=1 // loop_body
      %s20 = ssub.s32 %s15, 1
      %s21 = ssub.s32 %s15, 2
      %s28 = sadd.s32 1, %s23
      %p29 = scmp.ge.s32.totalorder %s28, 1
      %s30 = scalar_select %p29, 0, %s28
      %s31 = sadd.s32 1, %s22
      %s32 = scalar_select %p29, %s31, %s22
      %p33 = scmp.ge.s32.totalorder %s32, 2
      %s34 = scalar_select %p33, 0, %s32
      %s35 = ssub.s32 %s22, %s34
      %s36 = ssub.s32 %s23, %s30
      %s37 = sor.u32 %s35, %s36
      %p38 = scmp.eq.s32.totalorder %s37, 0
      %s40 = sadd.s32 %s39, 1
      %s41 = scalar_select %p38, %s39, %s40
      %p44 = pneg %p38
      %p45 = scmp.eq.s32.totalorder %s15, 1
      %p46 = por %p44, %p45
      %p47 = scmp.ne.s32.totalorder %s39, %s42
      %p48 = scmp.eq.s32.totalorder %s15, 0
      %p49 = por %p47, %p48
      %p50 = scmp.ne.s32.totalorder %s39, %s42
      %p51 = scmp.eq.s32.totalorder %s20, 1
      %p52 = por %p50, %p51
      %p53 = scmp.ne.s32.totalorder %s42, %s43
      %p54 = scmp.eq.s32.totalorder %s20, 0
      %p55 = por %p53, %p54
      %p56 = scmp.ne.s32.totalorder %s42, %s43
      %p57 = scmp.eq.s32.totalorder %s21, 1
      %p58 = por %p56, %p57
      %p60 = scmp.ne.s32.totalorder %s43, %s59
      %p61 = scmp.eq.s32.totalorder %s21, 0
      %p62 = por %p60, %p61
      %s63 = ssub.s32 %s22, %s34
      %p64 = scmp.eq.s32.totalorder %s63, 0
      %s66 = sadd.s32 %s65, 1
      %s67 = scalar_select %p64, %s65, %s66
      %p70 = pneg %p64
      %p71 = scmp.eq.s32.totalorder %s15, 1
      %p72 = por %p70, %p71
      %p73 = scmp.ne.s32.totalorder %s65, %s68
      %p74 = scmp.eq.s32.totalorder %s15, 0
      %p75 = por %p73, %p74
      %p76 = scmp.ne.s32.totalorder %s65, %s68
      %p77 = scmp.eq.s32.totalorder %s20, 1
      %p78 = por %p76, %p77
      %p79 = scmp.ne.s32.totalorder %s68, %s69
      %p80 = scmp.eq.s32.totalorder %s20, 0
      %p81 = por %p79, %p80
      %p82 = scmp.ne.s32.totalorder %s68, %s69
      %p83 = scmp.eq.s32.totalorder %s21, 1
      %p84 = por %p82, %p83
      %p86 = scmp.ne.s32.totalorder %s69, %s85
      %p87 = scmp.eq.s32.totalorder %s21, 0
      %p88 = por %p86, %p87
      %s89 = ssub.s32 %s22, %s34
      %p90 = scmp.eq.s32.totalorder %s89, 0
      %s92 = sadd.s32 %s91, 1
      %s93 = scalar_select %p90, %s91, %s92
      %p96 = pneg %p90
      %p97 = scmp.eq.s32.totalorder %s15, 1
      %p98 = por %p96, %p97
      %p99 = scmp.ne.s32.totalorder %s91, %s94
      %p100 = scmp.eq.s32.totalorder %s15, 0
      %p101 = por %p99, %p100
      %p102 = scmp.ne.s32.totalorder %s91, %s94
      %p103 = scmp.eq.s32.totalorder %s20, 1
      %p104 = por %p102, %p103
      %p105 = scmp.ne.s32.totalorder %s94, %s95
      %p106 = scmp.eq.s32.totalorder %s20, 0
      %p107 = por %p105, %p106
      %p108 = scmp.ne.s32.totalorder %s94, %s95
      %p109 = scmp.eq.s32.totalorder %s21, 1
      %p110 = por %p108, %p109
      %p112 = scmp.ne.s32.totalorder %s95, %s111
      %p113 = scmp.eq.s32.totalorder %s21, 0
      %p114 = por %p112, %p113
      %s115 = ssub.s32 %s22, %s34
      %s116 = ssub.s32 %s23, %s30
      %s117 = sor.u32 %s115, %s116
      %p118 = scmp.eq.s32.totalorder %s117, 0
      %s120 = sadd.s32 %s119, 1
      %s121 = scalar_select %p118, %s119, %s120
      %p124 = pneg %p118
      %p125 = scmp.eq.s32.totalorder %s15, 1
      %p126 = por %p124, %p125
      %p127 = scmp.ne.s32.totalorder %s119, %s122
      %p128 = scmp.eq.s32.totalorder %s15, 0
      %p129 = por %p127, %p128
      %p130 = scmp.ne.s32.totalorder %s119, %s122
      %p131 = scmp.eq.s32.totalorder %s20, 1
      %p132 = por %p130, %p131
      %p133 = scmp.ne.s32.totalorder %s122, %s123
      %p134 = scmp.eq.s32.totalorder %s20, 0
      %p135 = por %p133, %p134
      %p136 = scmp.ne.s32.totalorder %s122, %s123
      %p137 = scmp.eq.s32.totalorder %s21, 1
      %p138 = por %p136, %p137
      %p140 = scmp.ne.s32.totalorder %s123, %s139
      %p141 = scmp.eq.s32.totalorder %s21, 0
      %p142 = por %p140, %p141
      %p143 = scmp.le.s32.totalorder 1, %s15
      %p144 = scmp.lt.s32.totalorder %s15, 3
      %p145 = pnand %p143, %p144
      %p146 = pneg %p145
      // Predicated region
      $region9: #{fused_readout.1} parent=5 // pred_check
        _
      $region10: #{fused_readout.1} parent=5 // pred_check_branch
        %148 = sbr.rel (%p145) target = $region12
      $region11: #{fused_readout.1} parent=5 // pred_region
        %s149 = ssub.s32 %s15, 1
      $region12: #{fused_readout.1} parent=5 // pred_fallthru
        _
      %p150 = scmp.lt.s32.totalorder %s15, 2
      // Predicated region
      $region13: #{fused_readout.1} parent=5 // pred_check
        %p151 = pneg %p150
      $region14: #{fused_readout.1} parent=5 // pred_check_branch
        %153 = sbr.rel (%p151) target = $region16
      $region15: #{fused_readout.1} parent=5 // pred_region
        // Predicated region
        $region17: #{fused_readout.1} parent=15 // pred_check
          %p154 = pneg %p49
        $region18: #{fused_readout.1} parent=15 // pred_check_branch
          %156 = sbr.rel (%p154) target = $region20
        $region19: #{fused_readout.1} parent=15 // pred_region
          %p157 = scmp.lt.s32.totalorder %s22, 1
          %s158 = scalar_select %p157, %s22, 1
          %p159 = scmp.lt.s32.totalorder %s23, 0
          %s160 = scalar_select %p159, %s23, 0
          %s161 = smul.addr %s158, 4
          %s162 = sadd.s32 %s160, %s161
          %s163 = smul.addr %s162, 4
          %s164 = scalar_lea.vmem %s0, %s163
        $region20: #{fused_readout.1} parent=15 // pred_fallthru
          _
        // Predicated region
        $region21: #{fused_readout.1} parent=15 // pred_check
          %p165 = pneg %p75
        $region22: #{fused_readout.1} parent=15 // pred_check_branch
          %167 = sbr.rel (%p165) target = $region24
        $region23: #{fused_readout.1} parent=15 // pred_region
          %s168 = sand.u32 %s65, 1
          %s169 = scalar_lea.sflag [#allocation3], %s168
          %s170 = sand.u32 %s65, 1
          %s171 = smul.addr %s170, 8
          %s172 = scalar_lea.vmem [#allocation2], %s171
          %s174 = ssub.s32 128, 128
          %175 = vsyncadd %s169, %s174
          %s176 = smul.addr %s22, 2
          %s177 = smul.addr %s176, 64
          %s178 = scalar_lea.hbm %s1, %s177
          %s179 = sshll.u32 %s172, 4
          %s180 = int_to_ptr.vmem [resolvable:$true] %s179
          %185 = dma.hbm_to_vmem [thread:$0]  %s178, 128, %s180, %s169, 64, 64, 4
        $region24: #{fused_readout.1} parent=15 // pred_fallthru
          _
        // Predicated region
        $region25: #{fused_readout.1} parent=15 // pred_check
          %p186 = pneg %p101
        $region26: #{fused_readout.1} parent=15 // pred_check_branch
          %188 = sbr.rel (%p186) target = $region28
        $region27: #{fused_readout.1} parent=15 // pred_region
          %p189 = scmp.lt.s32.totalorder %s22, 1
          %s190 = scalar_select %p189, %s22, 1
          %s191 = smul.addr %s190, 2
          %s192 = smul.addr %s191, 8
          %s193 = scalar_lea.vmem %s2, %s192
        $region28: #{fused_readout.1} parent=15 // pred_fallthru
          _
      $region16: #{fused_readout.1} parent=5 // pred_fallthru
        _
      %p194 = scmp.le.s32.totalorder 1, %s15
      %p195 = scmp.lt.s32.totalorder %s15, 3
      %p196 = pnand %p194, %p195
      %p197 = pneg %p196
      // Predicated region
      $region29: #{fused_readout.1} parent=5 // pred_check
        _
      $region30: #{fused_readout.1} parent=5 // pred_check_branch
        %199 = sbr.rel (%p196) target = $region32
      $region31: #{fused_readout.1} parent=5 // pred_region
        %s200 = ssub.s32 %s15, 1
        %s201 = sand.u32 %s68, 1
        %s202 = scalar_lea.sflag [#allocation3], %s201
        %s203 = sand.u32 %s68, 1
        %s204 = smul.addr %s203, 8
        %s205 = scalar_lea.vmem [#allocation2], %s204
        // Predicated region
        $region33: #{fused_readout.1} parent=31 // pred_check
          %p206 = pneg %p81
        $region34: #{fused_readout.1} parent=31 // pred_check_branch
          %208 = sbr.rel (%p206) target = $region36
        $region35: #{fused_readout.1} parent=31 // pred_region
          %209 = dma.done %s202, 128
        $region36: #{fused_readout.1} parent=31 // pred_fallthru
          _
        %p210 = scmp.lt.s32.totalorder %s24, 1
        %s211 = scalar_select %p210, %s24, 1
        %p212 = scmp.lt.s32.totalorder %s25, 0
        %s213 = scalar_select %p212, %s25, 0
        %s214 = smul.addr %s211, 4
        %s215 = sadd.s32 %s213, %s214
        %s216 = smul.addr %s215, 4
        %s217 = scalar_lea.vmem %s0, %s216
        %p218 = pneg %p55
        %p219 = pneg %p52
        %s220 = sand.u32 %s68, 1
        %s221 = scalar_lea.sflag [#allocation3], %s220
        %s222 = sand.u32 %s68, 1
        %s223 = smul.addr %s222, 8
        %s224 = scalar_lea.vmem [#allocation2], %s223
        %p225 = pneg %p81
        %p226 = pneg %p78
        %p227 = scmp.lt.s32.totalorder %s24, 1
        %s228 = scalar_select %p227, %s24, 1
        %s229 = smul.addr %s228, 2
        %s230 = smul.addr %s229, 8
        %s231 = scalar_lea.vmem %s2, %s230
        %p232 = pneg %p107
        %p233 = pneg %p104
        %p234 = pneg %p135
        %p235 = pneg %p132
        %s236 = sand.u32 %s122, 1
        %s237 = scalar_lea.sflag [#allocation4], %s236
        %s238 = sand.u32 %s122, 1
        %s239 = smul.addr %s238, 16
        %s240 = scalar_lea.vmem [#allocation5], %s239
        %p241 = scmp.lt.s32.totalorder %s24, 1
        %s242 = scalar_select %p241, %s24, 1
        %p243 = scmp.lt.s32.totalorder %s25, 0
        %s244 = scalar_select %p243, %s25, 0
        %s245 = smul.addr %s242, 4
        %s246 = sadd.s32 %s244, %s245
        %s247 = smul.addr %s246, 4
        %s248 = scalar_lea.vmem %s0, %s247
        %p249 = scmp.lt.s32.totalorder %s24, 1
        %s250 = scalar_select %p249, %s24, 1
        %s251 = smul.addr %s250, 2
        %s252 = smul.addr %s251, 8
        %s253 = scalar_lea.vmem %s2, %s252
        %v255 = vld [vmem:[%s205] sm:$0xf]
        %v256 = vld [vmem:[%s205 + $0x4] sm:$0xf]
        %v257 = vld [vmem:[%s248] sm:$0xf]
        %v258 = vld [vmem:[%s248 + $0x4] sm:$0xf]
        %v259 = vld [vmem:[%s248 + $0x8] sm:$0xf]
        %v260 = vld [vmem:[%s248 + $0xc] sm:$0xf]
        %v261 = vld [vmem:[%s253] sm:$0xff]
        %v262 = vld [vmem:[%s253 + $0x8] sm:$0xff]
        %264 = vset.pattern.permute.xlu0 0
        %265 = vperm.xlu0 %264, %v261
        %v266 = vpop.permute.xlu0 %265
        %269 = vset.pattern.permute.xlu0 0
        %270 = vperm.xlu0 %269, %v262
        %v271 = vpop.permute.xlu0 %270
        %v275 = vunpack.c.l.b16 %v255
        %v276 = vunpack.c.l.b16 %v256
        %v277 = vpack.c.b16 %v276, %v275
        %v282 = vunpack.c.l.b16 %v257
        %v283 = vunpack.c.l.b16 %v258
        %v284 = vunpack.c.l.b16 %v259
        %v285 = vunpack.c.l.b16 %v260
        %v286 = vpack.c.b16 %v283, %v282
        %v287 = vpack.c.b16 %v285, %v284
        %vm290 = vcmask 261120
        %v292 = vsel %vm290, %v277, 0
        %294 = vmatprep.subr.bf16.mxu0 0
        %295 = vmatpush1.bf16.msra.mxu0 %v286
        %296 = vmatprep.subr.bf16.mxu0 0
        %297 = vmatpush1.bf16.msra.mxu0 %v287
        %298 = vmatprep.subr.bf16.mxu0 0
        %299 = vmatpush1.bf16.msra.mxu0 0
        %300 = vmatprep.subr.bf16.mxu0 0
        %301 = vmatpush1.bf16.msra.mxu0 0
        %302 = vmatprep.subr.bf16.mxu0 0
        %303 = vmatpush1.bf16.msra.mxu0 0
        %304 = vmatprep.subr.bf16.mxu0 0
        %305 = vmatpush1.bf16.msra.mxu0 0
        %306 = vmatprep.subr.bf16.mxu0 0
        %307 = vmatpush1.bf16.msra.mxu0 0
        %308 = vmatprep.subr.bf16.mxu0 0
        %309 = vmatpush1.bf16.msra.mxu0 0
        %310 = vmatprep.subr.bf16.mxu0 0
        %311 = vmatpush1.bf16.msra.mxu0 0
        %312 = vmatprep.subr.bf16.mxu0 0
        %313 = vmatpush1.bf16.msra.mxu0 0
        %314 = vmatprep.subr.bf16.mxu0 0
        %315 = vmatpush1.bf16.msra.mxu0 0
        %316 = vmatprep.subr.bf16.mxu0 0
        %317 = vmatpush1.bf16.msra.mxu0 0
        %318 = vmatprep.subr.bf16.mxu0 0
        %319 = vmatpush1.bf16.msra.mxu0 0
        %320 = vmatprep.subr.bf16.mxu0 0
        %321 = vmatpush1.bf16.msra.mxu0 0
        %322 = vmatprep.subr.bf16.mxu0 0
        %323 = vmatpush1.bf16.msra.mxu0 0
        %324 = vmatprep.subr.bf16.mxu0 0
        %325 = vmatpush1.bf16.msra.mxu0 0
        %326 = vmatprep.mubr.bf16.mxu0 0
        %327 = vmatmul.mubr.bf16.gmra.mrb[0].mxu0 %v292
        %v328 = vpop.f32.mrb[0].mxu0
        %v329 = vadd.f32 %v266, %v328
        %v330 = vpop.f32.mrb[0].mxu0
        %v331 = vpop.f32.mrb[0].mxu0
        %v332 = vadd.f32 %v271, %v331
        %v333 = vpop.f32.mrb[0].mxu0
        %334 = vdwg.mxu0
        %335 = vst [vmem:[%s240] sm:$0xff] %v329
        %336 = vst [vmem:[%s240 + $0x8] sm:$0xff] %v332
        %s337 = sand.u32 %s122, 1
        %s338 = scalar_lea.sflag [#allocation4], %s337
        %s339 = sand.u32 %s122, 1
        %s340 = smul.addr %s339, 16
        %s341 = scalar_lea.vmem [#allocation5], %s340
        // Predicated region
        $region37: #{fused_readout.1} parent=31 // pred_check
          %p342 = pneg %p132
        $region38: #{fused_readout.1} parent=31 // pred_check_branch
          %344 = sbr.rel (%p342) target = $region40
        $region39: #{fused_readout.1} parent=31 // pred_region
          %s346 = ssub.s32 256, 256
          %347 = vsyncadd %s338, %s346
          %s348 = smul.addr %s24, 2
          %s349 = sadd.s32 %s25, %s348
          %s350 = smul.addr %s349, 128
          %s351 = scalar_lea.hbm %s3, %s350
          %s352 = sshll.u32 %s341, 4
          %s353 = int_to_ptr.vmem [resolvable:$true] %s352
          %358 = dma.vmem_to_hbm [thread:$0]  %s353, 256, %s351, %s338, 128, 128, 8
        $region40: #{fused_readout.1} parent=31 // pred_fallthru
          _
      $region32: #{fused_readout.1} parent=5 // pred_fallthru
        _
      %p359 = scmp.le.s32.totalorder 2, %s15
      // Predicated region
      $region41: #{fused_readout.1} parent=5 // pred_check
        %p360 = pneg %p359
      $region42: #{fused_readout.1} parent=5 // pred_check_branch
        %362 = sbr.rel (%p360) target = $region44
      $region43: #{fused_readout.1} parent=5 // pred_region
        %s363 = ssub.s32 %s15, 2
        // Predicated region
        $region45: #{fused_readout.1} parent=43 // pred_check
          %p364 = pneg %p138
        $region46: #{fused_readout.1} parent=43 // pred_check_branch
          %366 = sbr.rel (%p364) target = $region48
        $region47: #{fused_readout.1} parent=43 // pred_region
          %s367 = sand.u32 %s123, 1
          %s368 = scalar_lea.sflag [#allocation4], %s367
          %s369 = sand.u32 %s123, 1
          %s370 = smul.addr %s369, 16
          %s371 = scalar_lea.vmem [#allocation5], %s370
          %372 = dma.done %s368, 256
        $region48: #{fused_readout.1} parent=43 // pred_fallthru
          _
      $region44: #{fused_readout.1} parent=5 // pred_fallthru
        _
    $region6: #{fused_readout.1} parent=1 // loop_footer
      %s19 = sadd.s32 1, %s15
    $region7: #{fused_readout.1} parent=1 // loop_footer_branch
      %14 = sbr.rel target = $region3
    $region8: #{fused_readout.1} parent=1 // loop_exit
      _
    %373 = vsyncpa [#allocation3], 1
    %s374 = scalar_lea.sflag [#allocation3], 1
    %375 = vsyncpa %s374, 1
    %376 = vsyncpa [#allocation4], 1
    %s377 = scalar_lea.sflag [#allocation4], 1
    %378 = vsyncpa %s377, 1

</llo_original>
